<compile_context>
chip_gen: v7x
topology: tpu7x:2x2x1
jax: 0.10.0
libtpu: 0.0.40
codegen_flags: <defaults>
</compile_context>

<pallas_src>
import jax
import jax.numpy as jnp
import numpy as np
from jax import lax
from jax.experimental import pallas as pl
from jax.experimental.pallas import tpu as pltpu

NEG_SLOPE = 0.01  # torch F.leaky_relu default negative slope


def _leaky_relu(x):
    return jnp.where(x >= 0, x, NEG_SLOPE * x)


def _round_up(a, m):
    return ((a + m - 1) // m) * m


def _blk_vmem_bytes(block_shape, dtype):
    """Rough VMEM footprint of one block (last dim padded to 128 lanes,
    second-to-last to 8 sublanes)."""
    s = list(block_shape)
    s[-1] = _round_up(s[-1], 128)
    if len(s) >= 2:
        s[-2] = _round_up(s[-2], 8)
    n = 1
    for v in s:
        n *= int(v)
    return n * np.dtype(dtype).itemsize


def _make_kernel(num_layers, fuse):
    """num_layers = number of hidden (leaky-relu) layers of the node->module MLP.
    fuse = fold the N=1 scalar output layer into the module->node weights
    (only worthwhile for small num_vars)."""
    L = num_layers
    f32, bf16 = jnp.float32, jnp.bfloat16

    def kernel(*refs):
        it = iter(refs)
        x_ref = next(it)                               # (dp, TB)          f32
        mask_in_ref = next(it)                         # (TM, dp, TB)      bf16
        w_refs = [next(it) for _ in range(L)]          # (TM, hid, in_l)   bf16
        b_refs = [next(it) for _ in range(L)]          # (TM, hid, 1)      f32
        mask_out_ref = next(it)                        # (TM, dp, TB)      bf16
        if fuse:
            w_eff_ref = next(it)                       # (TM, dp, in_last) bf16
            b_eff_ref = next(it)                       # (TM, dp, 1)       f32
        else:
            w_last_ref = next(it)                      # (TM, 1, in_last)  bf16
            b_last_ref = next(it)                      # (TM, 1, 1)        f32
            wm2n_ref = next(it)                        # (TM, dp, 1)       f32
        b_m2n_ref = next(it)                           # (dp, 1)           f32
        out_ref = next(it)                             # (dp, TB)  resident acc

        mt = pl.program_id(1)                          # module (reduction) axis

        # per-module masked input; mask VPU math in f32 (v5e-safe), MXU feeds bf16
        x = x_ref[...]                                               # (dp, TB)
        h = (mask_in_ref[...].astype(f32) * x).astype(bf16)          # (TM, dp, TB)

        # node -> module MLP, batched over the module tile (MXU, bf16 x bf16 -> f32)
        for l in range(L):
            h = lax.dot_general(w_refs[l][...], h,
                                (((2,), (1,)), ((0,), (0,))),
                                preferred_element_type=f32)          # (TM, hid, TB)
            h = _leaky_relu(h + b_refs[l][...]).astype(bf16)

        if fuse:
            # small num_vars: one lane-dense (dp x in_last) matmul per module
            y = lax.dot_general(w_eff_ref[...], h,
                                (((2,), (1,)), ((0,), (0,))),
                                preferred_element_type=f32)          # (TM, dp, TB)
            y = y + b_eff_ref[...]
        else:
            # large num_vars: N=1 scalar layer + rank-1 module->node VPU multiply
            s = lax.dot_general(w_last_ref[...], h,
                                (((2,), (1,)), ((0,), (0,))),
                                preferred_element_type=f32)          # (TM, 1, TB)
            s = s + b_last_ref[...]
            y = wm2n_ref[...] * s                                    # (TM, dp, TB)

        contrib = jnp.sum(mask_out_ref[...].astype(f32) * y, axis=0)  # (dp, TB)

        @pl.when(mt == 0)
        def _():
            out_ref[...] = jnp.broadcast_to(b_m2n_ref[...], out_ref.shape)

        out_ref[...] += contrib

    return kernel


def mlp_modular_forward(x, mask_node2module, mask_module2node, params, *,
                        batch_tile=None, module_tile=None, fuse_output=None):
    """Forward pass of MLPModularGaussianModule.

    x:                  (B, num_vars) float
    mask_node2module:   (num_modules, num_vars, B)  module-major, lane-dense Gumbel mask
    mask_module2node:   (num_modules, num_vars, B)  module-major, lane-dense Gumbel mask
    params:             dict, see init_params()
    Returns (B, num_vars) float32 density parameters.
    """
    f32, bf16 = jnp.float32, jnp.bfloat16
    B, d = x.shape
    w_list = [jnp.asarray(w, f32) for w in params["weights_node2module"]]
    b_list = [jnp.asarray(b, f32) for b in params["biases_node2module"]]
    w_m2n = jnp.asarray(params["weights_module2node"], f32)      # (d, 1, M)
    b_m2n = jnp.asarray(params["biases_module2node"], f32)       # (d, 1)
    M = int(w_list[0].shape[0])
    L = len(w_list) - 1                                          # num hidden layers
    hid = int(w_list[0].shape[1]) if L > 0 else 1
    if M <= 0:
        raise ValueError("num_modules must be > 0")

    dp = _round_up(d, 8)                                         # sublane padding

    # ---- tiling: batch on lanes (128-multiples), module = last reduction axis ----
    if batch_tile is None:
        batch_tile = min(_round_up(B, 128), 256)
    TB = _round_up(batch_tile, 128)
    Bp = _round_up(B, TB)
    if module_tile is None:
        # keep the two double-buffered mask tiles within ~8 MiB of VMEM
        per_m = 2 * 2 * dp * TB * 2
        module_tile = max(1, min(M, (8 << 20) // max(per_m, 1)))
    TM = max(1, min(int(module_tile), M))
    Mp = _round_up(M, TM)
    grid = (Bp // TB, Mp // TM)

    if fuse_output is None:
        fuse_output = d <= 32      # fusion only pays off for small num_vars

    def pad_m(a):
        return jnp.pad(a, [(0, Mp - M)] + [(0, 0)] * (a.ndim - 1))

    # ---- parameter-side precompute (tiny, amortized over the batch) ----
    w_hid = []
    for l in range(L):
        w = w_list[l]                                            # (M, hid, in_l)
        if l == 0 and dp != d:
            w = jnp.pad(w, ((0, 0), (0, 0), (0, dp - d)))
        w_hid.append(pad_m(w).astype(bf16))
    b_hid = [pad_m(b_list[l]).reshape(Mp, hid, 1) for l in range(L)]

    w_last = w_list[L]                                           # (M, 1, in_last)
    if L == 0 and dp != d:
        w_last = jnp.pad(w_last, ((0, 0), (0, 0), (0, dp - d)))
    in_last = int(w_last.shape[2])
    b_last = b_list[L]                                           # (M, 1)
    wm2n_row = jnp.pad(jnp.transpose(w_m2n[:, 0, :], (1, 0)),
                       ((0, 0), (0, dp - d)))                    # (M, dp)
    b_m2n_col = jnp.pad(b_m2n, ((0, dp - d), (0, 0)))            # (dp, 1)

    # ---- data inputs (lane-dense: batch last) ----
    x_p = jnp.pad(jnp.asarray(x, f32).T, ((0, dp - d), (0, Bp - B)))        # (dp, Bp)
    m_in = jnp.pad(jnp.asarray(mask_node2module, bf16),
                   ((0, Mp - M), (0, dp - d), (0, Bp - B)))                 # (Mp, dp, Bp)
    m_out = jnp.pad(jnp.asarray(mask_module2node, bf16),
                    ((0, Mp - M), (0, dp - d), (0, Bp - B)))                # (Mp, dp, Bp)

    inputs, in_specs, blocks = [], [], []

    def add_input(arr, block_shape, index_map):
        inputs.append(arr)
        in_specs.append(pl.BlockSpec(block_shape, index_map))
        blocks.append((block_shape, arr.dtype))

    add_input(x_p, (dp, TB), lambda bt, mt: (0, bt))
    add_input(m_in, (TM, dp, TB), lambda bt, mt: (mt, 0, bt))
    for w in w_hid:
        add_input(w, (TM,) + tuple(w.shape[1:]), lambda bt, mt: (mt, 0, 0))
    for bb in b_hid:
        add_input(bb, (TM, hid, 1), lambda bt, mt: (mt, 0, 0))
    add_input(m_out, (TM, dp, TB), lambda bt, mt: (mt, 0, bt))
    if fuse_output:
        w_eff = pad_m(wm2n_row[:, :, None] * w_last[:, 0:1, :]).astype(bf16)   # (Mp, dp, in_last)
        b_eff = pad_m(wm2n_row * b_last).reshape(Mp, dp, 1)                    # (Mp, dp, 1)
        add_input(w_eff, (TM, dp, in_last), lambda bt, mt: (mt, 0, 0))
        add_input(b_eff, (TM, dp, 1), lambda bt, mt: (mt, 0, 0))
    else:
        w_last_p = pad_m(w_last).astype(bf16)                                  # (Mp, 1, in_last)
        b_last_p = pad_m(b_last).reshape(Mp, 1, 1)
        wm2n_col = pad_m(wm2n_row).reshape(Mp, dp, 1)
        add_input(w_last_p, (TM, 1, in_last), lambda bt, mt: (mt, 0, 0))
        add_input(b_last_p, (TM, 1, 1), lambda bt, mt: (mt, 0, 0))
        add_input(wm2n_col, (TM, dp, 1), lambda bt, mt: (mt, 0, 0))
    add_input(b_m2n_col, (dp, 1), lambda bt, mt: (0, 0))

    # explicit scoped-VMEM limit (headroom, capped below v7x's 64 MiB physical)
    vmem_est = sum(2 * _blk_vmem_bytes(s, dt) for s, dt in blocks)
    vmem_est += 2 * _blk_vmem_bytes((dp, TB), jnp.float32)
    vmem_limit = int(min(max(2 * vmem_est, 32 << 20), 64 << 20))

    out = pl.pallas_call(
        _make_kernel(L, fuse_output),
        out_shape=jax.ShapeDtypeStruct((dp, Bp), f32),
        grid_spec=pltpu.PrefetchScalarGridSpec(
            num_scalar_prefetch=0,
            grid=grid,
            in_specs=in_specs,
            out_specs=pl.BlockSpec((dp, TB), lambda bt, mt: (0, bt)),
        ),
        compiler_params=pltpu.CompilerParams(
            # batch tiles are independent (megacore / v7x 2nd TC); module tiles
            # accumulate into the resident output -> reduction axis last.
            dimension_semantics=("parallel", "arbitrary"),
            vmem_limit_bytes=vmem_limit),
    )(*inputs)
    return out[:d, :B].T                                          # (B, num_vars)


def reference_forward(x, mask_in_md, mask_out_md, params):
    """Pure-JAX replica of the PyTorch forward (module-major lane-dense masks),
    mirroring the kernel's bf16-operand / f32-accumulate matmuls."""
    f32 = jnp.float32

    def q(a):  # bf16 operand quantization (mirrors what the kernel feeds the MXU)
        return jnp.asarray(a, f32).astype(jnp.bfloat16).astype(f32)

    x = jnp.asarray(x, f32)                         # (B, d)
    mask_in = jnp.asarray(mask_in_md, f32)          # (M, d, B) = mask[t, j, b]
    mask_out = jnp.asarray(mask_out_md, f32)        # (M, d, B) = mask[t, i, b]
    w = [jnp.asarray(a, f32) for a in params["weights_node2module"]]
    b = [jnp.asarray(a, f32) for a in params["biases_node2module"]]
    w_m2n = jnp.asarray(params["weights_module2node"], f32)      # (d, 1, M)
    b_m2n = jnp.asarray(params["biases_module2node"], f32)       # (d, 1)
    L = len(w) - 1

    xm = q(mask_in * jnp.transpose(x)[None])                     # mask[t,j,b]*x[b,j]
    h = jnp.einsum("tij,tjb->bti", q(w[0]), xm) + b[0][None]
    for l in range(1, L + 1):
        h = _leaky_relu(h)
        h = jnp.einsum("tij,btj->bti", q(w[l]), q(h)) + b[l][None]
    s = h[:, :, 0]                                               # (B, M)
    out = jnp.einsum("iot,tib,bt->bi", w_m2n, mask_out, s) + b_m2n[:, 0][None]
    return out                                                   # (B, num_vars)


def init_params(key, num_vars, num_layers, num_modules, hid_dim):
    """Deterministic parameter init with the shapes from the module __init__.
    (torch inits biases to zero; small nonzero biases exercise the bias paths —
     forward semantics are identical.)"""
    gain = np.sqrt(2.0 / (1.0 + NEG_SLOPE ** 2))   # calculate_gain('leaky_relu')
    w_list, b_list = [], []
    for i in range(num_layers + 1):
        in_dim = num_vars if i == 0 else hid_dim
        out_dim = 1 if i == num_layers else hid_dim
        key, kw, kb = jax.random.split(key, 3)
        bound = gain * np.sqrt(6.0 / (in_dim + out_dim))
        w_list.append(jax.random.uniform(kw, (num_modules, out_dim, in_dim),
                                         jnp.float32, -bound, bound))
        b_list.append(0.01 * jax.random.normal(kb, (num_modules, out_dim), jnp.float32))
    key, kw, kb = jax.random.split(key, 3)
    bound = gain * np.sqrt(6.0 / (num_modules + 1))
    w_m2n = jax.random.uniform(kw, (num_vars, 1, num_modules), jnp.float32, -bound, bound)
    b_m2n = 0.01 * jax.random.normal(kb, (num_vars, 1), jnp.float32)
    return {
        "weights_node2module": w_list,
        "biases_node2module": b_list,
        "weights_module2node": w_m2n,
        "biases_module2node": b_m2n,
    }


if __name__ == "__main__":
    def run_case(key, num_vars, num_layers, num_modules, hid_dim, batch):
        kp, kx, k1, k2 = jax.random.split(key, 4)
        params = init_params(kp, num_vars, num_layers, num_modules, hid_dim)
        x = jax.random.normal(kx, (batch, num_vars), jnp.float32)
        # Gumbel masks, module-major & lane-dense (num_modules, num_vars, batch),
        # streamed in bf16 (both kernel and reference see the same bf16 values).
        mask_in = jax.random.uniform(k1, (num_modules, num_vars, batch),
                                     jnp.float32).astype(jnp.bfloat16)
        mask_out = jax.random.uniform(k2, (num_modules, num_vars, batch),
                                      jnp.float32).astype(jnp.bfloat16)
        out = jax.block_until_ready(
            mlp_modular_forward(x, mask_in, mask_out, params))
        ref = reference_forward(x, mask_in, mask_out, params)
        # bf16 MXU operands vs an (effectively) bf16-consistent reference:
        # remaining delta is f32-accumulation reassociation + the fused-weight
        # quantization order -> loose-but-meaningful tolerance.
        np.testing.assert_allclose(np.asarray(out), np.asarray(ref),
                                   rtol=2e-2, atol=2e-2)

    root = jax.random.PRNGKey(0)
    k_a, k_b = jax.random.split(root)
    # small num_vars -> fused output path (lane-dense demo config)
    run_case(k_a, num_vars=8, num_layers=2, num_modules=4, hid_dim=32, batch=4)
    # larger num_vars -> non-fused path (N=1 scalar layer + rank-1 VPU multiply)
    run_case(k_b, num_vars=40, num_layers=1, num_modules=6, hid_dim=16, batch=4)
    print("KERNEL_OK")
</pallas_src>

<mosaic_0001>
module attributes {stable_mosaic.version = 11 : i64} {
  func.func @kernel(%arg0: i32, %arg1: i32, %arg2: memref<8x128xf32, #tpu.memory_space<vmem>>, %arg3: memref<4x8x128xbf16, #tpu.memory_space<vmem>>, %arg4: memref<4x32x8xbf16, #tpu.memory_space<vmem>>, %arg5: memref<4x32x32xbf16, #tpu.memory_space<vmem>>, %arg6: memref<4x32x1xf32, #tpu.memory_space<vmem>>, %arg7: memref<4x32x1xf32, #tpu.memory_space<vmem>>, %arg8: memref<4x8x128xbf16, #tpu.memory_space<vmem>>, %arg9: memref<4x8x32xbf16, #tpu.memory_space<vmem>>, %arg10: memref<4x8x1xf32, #tpu.memory_space<vmem>>, %arg11: memref<8x1xf32, #tpu.memory_space<vmem>>, %arg12: memref<8x128xf32, #tpu.memory_space<vmem>>) attributes {dimension_semantics = [#tpu.dimension_semantics<parallel>, #tpu.dimension_semantics<arbitrary>], iteration_bounds = array<i64: 1, 1>, scalar_prefetch = 0 : i64, scratch_operands = 0 : i64, tpu.core_type = #tpu.core_type<tc>, window_params = [{transform_indices = @transform_0, window_bounds = array<i64: 8, 128>}, {transform_indices = @transform_1, window_bounds = array<i64: 4, 8, 128>}, {transform_indices = @transform_2, window_bounds = array<i64: 4, 32, 8>}, {transform_indices = @transform_3, window_bounds = array<i64: 4, 32, 32>}, {transform_indices = @transform_4, window_bounds = array<i64: 4, 32, 1>}, {transform_indices = @transform_5, window_bounds = array<i64: 4, 32, 1>}, {transform_indices = @transform_6, window_bounds = array<i64: 4, 8, 128>}, {transform_indices = @transform_7, window_bounds = array<i64: 4, 8, 32>}, {transform_indices = @transform_8, window_bounds = array<i64: 4, 8, 1>}, {pipeline_mode = #tpu.pipeline_mode<synchronous>, transform_indices = @transform_9, window_bounds = array<i64: 8, 1>}, {transform_indices = @transform_10, window_bounds = array<i64: 8, 128>}]} {
    %c0 = arith.constant 0 : index
    %c0_0 = arith.constant 0 : index
    %0 = vector.load %arg2[%c0, %c0_0] : memref<8x128xf32, #tpu.memory_space<vmem>>, vector<8x128xf32>
    %c0_1 = arith.constant 0 : index
    %c0_2 = arith.constant 0 : index
    %c0_3 = arith.constant 0 : index
    %1 = vector.load %arg3[%c0_1, %c0_2, %c0_3] : memref<4x8x128xbf16, #tpu.memory_space<vmem>>, vector<4x8x128xbf16>
    %2 = arith.extf %1 : vector<4x8x128xbf16> to vector<4x8x128xf32>
    %3 = vector.shape_cast %0 : vector<8x128xf32> to vector<1x8x128xf32>
    %4 = vector.broadcast %3 : vector<1x8x128xf32> to vector<4x8x128xf32>
    %5 = arith.mulf %2, %4 : vector<4x8x128xf32>
    %6 = arith.truncf %5 : vector<4x8x128xf32> to vector<4x8x128xbf16>
    %c0_4 = arith.constant 0 : index
    %c0_5 = arith.constant 0 : index
    %c0_6 = arith.constant 0 : index
    %7 = vector.load %arg4[%c0_4, %c0_5, %c0_6] : memref<4x32x8xbf16, #tpu.memory_space<vmem>>, vector<4x32x8xbf16>
    %cst = arith.constant dense<0.000000e+00> : vector<4x32x128xf32>
    %8 = tpu.matmul %7, %6, %cst {dimension_numbers = #tpu.dot_dimension_numbers<[2], [1], [1], [2], [0, 0, 0, 1, 1, 2], [0], [0]>} : vector<4x32x8xbf16>, vector<4x8x128xbf16>, vector<4x32x128xf32> -> vector<4x32x128xf32>
    %c0_7 = arith.constant 0 : index
    %c0_8 = arith.constant 0 : index
    %c0_9 = arith.constant 0 : index
    %9 = vector.load %arg6[%c0_7, %c0_8, %c0_9] : memref<4x32x1xf32, #tpu.memory_space<vmem>>, vector<4x32x1xf32>
    %10 = vector.broadcast %9 : vector<4x32x1xf32> to vector<4x32x128xf32>
    %11 = arith.addf %8, %10 : vector<4x32x128xf32>
    %cst_10 = arith.constant 0.000000e+00 : f32
    %12 = vector.broadcast %cst_10 : f32 to vector<4x32x128xf32>
    %13 = arith.cmpf oge, %11, %12 : vector<4x32x128xf32>
    %cst_11 = arith.constant 0.00999999977 : f32
    %14 = vector.broadcast %cst_11 : f32 to vector<4x32x128xf32>
    %15 = arith.mulf %14, %11 : vector<4x32x128xf32>
    %16 = arith.select %13, %11, %15 : vector<4x32x128xi1>, vector<4x32x128xf32>
    %17 = arith.truncf %16 : vector<4x32x128xf32> to vector<4x32x128xbf16>
    %c0_12 = arith.constant 0 : index
    %c0_13 = arith.constant 0 : index
    %c0_14 = arith.constant 0 : index
    %18 = vector.load %arg5[%c0_12, %c0_13, %c0_14] : memref<4x32x32xbf16, #tpu.memory_space<vmem>>, vector<4x32x32xbf16>
    %cst_15 = arith.constant dense<0.000000e+00> : vector<4x32x128xf32>
    %19 = tpu.matmul %18, %17, %cst_15 {dimension_numbers = #tpu.dot_dimension_numbers<[2], [1], [1], [2], [0, 0, 0, 1, 1, 2], [0], [0]>} : vector<4x32x32xbf16>, vector<4x32x128xbf16>, vector<4x32x128xf32> -> vector<4x32x128xf32>
    %c0_16 = arith.constant 0 : index
    %c0_17 = arith.constant 0 : index
    %c0_18 = arith.constant 0 : index
    %20 = vector.load %arg7[%c0_16, %c0_17, %c0_18] : memref<4x32x1xf32, #tpu.memory_space<vmem>>, vector<4x32x1xf32>
    %21 = vector.broadcast %20 : vector<4x32x1xf32> to vector<4x32x128xf32>
    %22 = arith.addf %19, %21 : vector<4x32x128xf32>
    %cst_19 = arith.constant 0.000000e+00 : f32
    %23 = vector.broadcast %cst_19 : f32 to vector<4x32x128xf32>
    %24 = arith.cmpf oge, %22, %23 : vector<4x32x128xf32>
    %cst_20 = arith.constant 0.00999999977 : f32
    %25 = vector.broadcast %cst_20 : f32 to vector<4x32x128xf32>
    %26 = arith.mulf %25, %22 : vector<4x32x128xf32>
    %27 = arith.select %24, %22, %26 : vector<4x32x128xi1>, vector<4x32x128xf32>
    %28 = arith.truncf %27 : vector<4x32x128xf32> to vector<4x32x128xbf16>
    %c0_21 = arith.constant 0 : index
    %c0_22 = arith.constant 0 : index
    %c0_23 = arith.constant 0 : index
    %29 = vector.load %arg9[%c0_21, %c0_22, %c0_23] : memref<4x8x32xbf16, #tpu.memory_space<vmem>>, vector<4x8x32xbf16>
    %cst_24 = arith.constant dense<0.000000e+00> : vector<4x8x128xf32>
    %30 = tpu.matmul %29, %28, %cst_24 {dimension_numbers = #tpu.dot_dimension_numbers<[2], [1], [1], [2], [0, 0, 0, 1, 1, 2], [0], [0]>} : vector<4x8x32xbf16>, vector<4x32x128xbf16>, vector<4x8x128xf32> -> vector<4x8x128xf32>
    %c0_25 = arith.constant 0 : index
    %c0_26 = arith.constant 0 : index
    %c0_27 = arith.constant 0 : index
    %31 = vector.load %arg10[%c0_25, %c0_26, %c0_27] : memref<4x8x1xf32, #tpu.memory_space<vmem>>, vector<4x8x1xf32>
    %32 = vector.broadcast %31 : vector<4x8x1xf32> to vector<4x8x128xf32>
    %33 = arith.addf %30, %32 : vector<4x8x128xf32>
    %c0_28 = arith.constant 0 : index
    %c0_29 = arith.constant 0 : index
    %c0_30 = arith.constant 0 : index
    %34 = vector.load %arg8[%c0_28, %c0_29, %c0_30] : memref<4x8x128xbf16, #tpu.memory_space<vmem>>, vector<4x8x128xbf16>
    %35 = arith.extf %34 : vector<4x8x128xbf16> to vector<4x8x128xf32>
    %36 = arith.mulf %35, %33 : vector<4x8x128xf32>
    %cst_31 = arith.constant dense<0.000000e+00> : vector<8x128xf32>
    %37 = vector.multi_reduction <add>, %36, %cst_31 [0] : vector<4x8x128xf32> to vector<8x128xf32>
    %c0_i32 = arith.constant 0 : i32
    %38 = arith.cmpi eq, %arg1, %c0_i32 : i32
    %39 = arith.extui %38 : i1 to i32
    %c0_i32_32 = arith.constant 0 : i32
    %40 = arith.cmpi ne, %39, %c0_i32_32 : i32
    scf.if %40 {
      %c0_37 = arith.constant 0 : index
      %c0_38 = arith.constant 0 : index
      %44 = vector.load %arg11[%c0_37, %c0_38] : memref<8x1xf32, #tpu.memory_space<vmem>>, vector<8x1xf32>
      %45 = vector.shape_cast %44 : vector<8x1xf32> to vector<8x1xf32>
      %46 = vector.broadcast %45 : vector<8x1xf32> to vector<8x128xf32>
      %c0_39 = arith.constant 0 : index
      %c0_40 = arith.constant 0 : index
      %47 = vector.load %arg12[%c0_39, %c0_40] : memref<8x128xf32, #tpu.memory_space<vmem>>, vector<8x128xf32>
      tpu.vector_store %arg12[%c0_39, %c0_40], %46 {strides = array<i32>} : memref<8x128xf32, #tpu.memory_space<vmem>>, vector<8x128xf32>,
    } else {
    }
    %c0_33 = arith.constant 0 : index
    %c0_34 = arith.constant 0 : index
    %41 = vector.load %arg12[%c0_33, %c0_34] : memref<8x128xf32, #tpu.memory_space<vmem>>, vector<8x128xf32>
    %42 = arith.addf %41, %37 : vector<8x128xf32>
    %c0_35 = arith.constant 0 : index
    %c0_36 = arith.constant 0 : index
    %43 = vector.load %arg12[%c0_35, %c0_36] : memref<8x128xf32, #tpu.memory_space<vmem>>, vector<8x128xf32>
    tpu.vector_store %arg12[%c0_35, %c0_36], %42 {strides = array<i32>} : memref<8x128xf32, #tpu.memory_space<vmem>>, vector<8x128xf32>,
    return
  }
  func.func @transform_0(%arg0: i32, %arg1: i32) -> (i32, i32) {
    %c0_i32 = arith.constant 0 : i32
    %c0_i32_0 = arith.constant 0 : i32
    return %c0_i32, %arg0 : i32, i32
  }
  func.func @transform_1(%arg0: i32, %arg1: i32) -> (i32, i32, i32) {
    %c0_i32 = arith.constant 0 : i32
    %c0_i32_0 = arith.constant 0 : i32
    return %arg1, %c0_i32, %arg0 : i32, i32, i32
  }
  func.func @transform_2(%arg0: i32, %arg1: i32) -> (i32, i32, i32) {
    %c0_i32 = arith.constant 0 : i32
    %c0_i32_0 = arith.constant 0 : i32
    %c0_i32_1 = arith.constant 0 : i32
    return %arg1, %c0_i32, %c0_i32_0 : i32, i32, i32
  }
  func.func @transform_3(%arg0: i32, %arg1: i32) -> (i32, i32, i32) {
    %c0_i32 = arith.constant 0 : i32
    %c0_i32_0 = arith.constant 0 : i32
    %c0_i32_1 = arith.constant 0 : i32
    return %arg1, %c0_i32, %c0_i32_0 : i32, i32, i32
  }
  func.func @transform_4(%arg0: i32, %arg1: i32) -> (i32, i32, i32) {
    %c0_i32 = arith.constant 0 : i32
    %c0_i32_0 = arith.constant 0 : i32
    %c0_i32_1 = arith.constant 0 : i32
    return %arg1, %c0_i32, %c0_i32_0 : i32, i32, i32
  }
  func.func @transform_5(%arg0: i32, %arg1: i32) -> (i32, i32, i32) {
    %c0_i32 = arith.constant 0 : i32
    %c0_i32_0 = arith.constant 0 : i32
    %c0_i32_1 = arith.constant 0 : i32
    return %arg1, %c0_i32, %c0_i32_0 : i32, i32, i32
  }
  func.func @transform_6(%arg0: i32, %arg1: i32) -> (i32, i32, i32) {
    %c0_i32 = arith.constant 0 : i32
    %c0_i32_0 = arith.constant 0 : i32
    return %arg1, %c0_i32, %arg0 : i32, i32, i32
  }
  func.func @transform_7(%arg0: i32, %arg1: i32) -> (i32, i32, i32) {
    %c0_i32 = arith.constant 0 : i32
    %c0_i32_0 = arith.constant 0 : i32
    %c0_i32_1 = arith.constant 0 : i32
    return %arg1, %c0_i32, %c0_i32_0 : i32, i32, i32
  }
  func.func @transform_8(%arg0: i32, %arg1: i32) -> (i32, i32, i32) {
    %c0_i32 = arith.constant 0 : i32
    %c0_i32_0 = arith.constant 0 : i32
    %c0_i32_1 = arith.constant 0 : i32
    return %arg1, %c0_i32, %c0_i32_0 : i32, i32, i32
  }
  func.func @transform_9(%arg0: i32, %arg1: i32) -> (i32, i32) {
    %c0_i32 = arith.constant 0 : i32
    %c0_i32_0 = arith.constant 0 : i32
    %c0_i32_1 = arith.constant 0 : i32
    return %c0_i32, %c0_i32_0 : i32, i32
  }
  func.func @transform_10(%arg0: i32, %arg1: i32) -> (i32, i32) {
    %c0_i32 = arith.constant 0 : i32
    %c0_i32_0 = arith.constant 0 : i32
    return %c0_i32, %arg0 : i32, i32
  }
}

</mosaic_0001>

<llo_original>
// kernel: tpu_custom_call.1
$region0: #{tpu_custom_call.1}
  #allocation0 [shape = 'u32[]', space=smem, size = 0x4, offset = 0x4, fixed_abs, tag = 'smem constant byte address 0x4 - core index']
  #allocation1 [shape = 'u32[144,128]{1,0:T(1,128)}', space=vmem, size = 0x12000, scoped, tag = 'internal scratch']
  %s0 = inlined_call_operand.vmem [shape: f32[8,128], index: 0, kind: input, shape index: {}]
  %s1 = inlined_call_operand.vmem [shape: bf16[4,8,128], index: 1, kind: input, shape index: {}]
  %s2 = inlined_call_operand.vmem [shape: bf16[4,32,8], index: 2, kind: input, shape index: {}]
  %s3 = inlined_call_operand.vmem [shape: bf16[4,32,32], index: 3, kind: input, shape index: {}]
  %s4 = inlined_call_operand.vmem [shape: f32[4,32,1], index: 4, kind: input, shape index: {}]
  %s5 = inlined_call_operand.vmem [shape: f32[4,32,1], index: 5, kind: input, shape index: {}]
  %s6 = inlined_call_operand.vmem [shape: bf16[4,8,128], index: 6, kind: input, shape index: {}]
  %s7 = inlined_call_operand.vmem [shape: bf16[4,8,32], index: 7, kind: input, shape index: {}]
  %s8 = inlined_call_operand.vmem [shape: f32[4,8,1], index: 8, kind: input, shape index: {}]
  %s9 = inlined_call_operand.vmem [shape: f32[8,1], index: 9, kind: input, shape index: {}]
  %s10 = inlined_call_operand.hbm [shape: f32[8,128], index: 10, kind: output, shape index: {}]
  %s11 = sld [smem:[#allocation0]]
  $region54: #{tpu_custom_call.1} parent=0
    _
  %s13 = ssub.s32 1, %s11
  %s14 = scalar_select 0, %s13, %s11
  $region1: #{tpu_custom_call.1} parent=0
    #allocation2 [shape = 'u8[4096]{0}', space=vmem, size = 0x1000, scoped, tag = 'output window, operand 0, single buffered']
    #allocation3 [shape = 's32[1]{0}', space=sflag, size = 0x4, scoped, tag = 'scoped memory for tpu_custom_call.1']
    %15 = vsyncpa [#allocation3], 0
    // Predicated region
    $region2: #{tpu_custom_call.1} parent=1 // pred_check
      _
    $region3: #{tpu_custom_call.1} parent=1 // pred_check_branch
      %17 = sbr.rel (0) target = $region5
    $region4: #{tpu_custom_call.1} parent=1 // pred_region
      _
    $region5: #{tpu_custom_call.1} parent=1 // pred_fallthru
      _
    // Predicated region
    $region6: #{tpu_custom_call.1} parent=1 // pred_check
      _
    $region7: #{tpu_custom_call.1} parent=1 // pred_check_branch
      %19 = sbr.rel (0) target = $region9
    $region8: #{tpu_custom_call.1} parent=1 // pred_region
      _
    $region9: #{tpu_custom_call.1} parent=1 // pred_fallthru
      _
    // Predicated region
    $region10: #{tpu_custom_call.1} parent=1 // pred_check
      _
    $region11: #{tpu_custom_call.1} parent=1 // pred_check_branch
      %21 = sbr.rel (0) target = $region13
    $region12: #{tpu_custom_call.1} parent=1 // pred_region
      _
    $region13: #{tpu_custom_call.1} parent=1 // pred_fallthru
      _
    // Predicated region
    $region14: #{tpu_custom_call.1} parent=1 // pred_check
      _
    $region15: #{tpu_custom_call.1} parent=1 // pred_check_branch
      %23 = sbr.rel (0) target = $region17
    $region16: #{tpu_custom_call.1} parent=1 // pred_region
      _
    $region17: #{tpu_custom_call.1} parent=1 // pred_fallthru
      _
    // Predicated region
    $region18: #{tpu_custom_call.1} parent=1 // pred_check
      _
    $region19: #{tpu_custom_call.1} parent=1 // pred_check_branch
      %25 = sbr.rel (0) target = $region21
    $region20: #{tpu_custom_call.1} parent=1 // pred_region
      _
    $region21: #{tpu_custom_call.1} parent=1 // pred_fallthru
      _
    // Predicated region
    $region22: #{tpu_custom_call.1} parent=1 // pred_check
      _
    $region23: #{tpu_custom_call.1} parent=1 // pred_check_branch
      %27 = sbr.rel (0) target = $region25
    $region24: #{tpu_custom_call.1} parent=1 // pred_region
      _
    $region25: #{tpu_custom_call.1} parent=1 // pred_fallthru
      _
    // Predicated region
    $region26: #{tpu_custom_call.1} parent=1 // pred_check
      _
    $region27: #{tpu_custom_call.1} parent=1 // pred_check_branch
      %29 = sbr.rel (0) target = $region29
    $region28: #{tpu_custom_call.1} parent=1 // pred_region
      _
    $region29: #{tpu_custom_call.1} parent=1 // pred_fallthru
      _
    // Predicated region
    $region30: #{tpu_custom_call.1} parent=1 // pred_check
      _
    $region31: #{tpu_custom_call.1} parent=1 // pred_check_branch
      %31 = sbr.rel (0) target = $region33
    $region32: #{tpu_custom_call.1} parent=1 // pred_region
      _
    $region33: #{tpu_custom_call.1} parent=1 // pred_fallthru
      _
    // Predicated region
    $region34: #{tpu_custom_call.1} parent=1 // pred_check
      _
    $region35: #{tpu_custom_call.1} parent=1 // pred_check_branch
      %33 = sbr.rel (0) target = $region37
    $region36: #{tpu_custom_call.1} parent=1 // pred_region
      _
    $region37: #{tpu_custom_call.1} parent=1 // pred_fallthru
      _
    // Predicated region
    $region38: #{tpu_custom_call.1} parent=1 // pred_check
      _
    $region39: #{tpu_custom_call.1} parent=1 // pred_check_branch
      %35 = sbr.rel (0) target = $region41
    $region40: #{tpu_custom_call.1} parent=1 // pred_region
      _
    $region41: #{tpu_custom_call.1} parent=1 // pred_fallthru
      _
    %v37 = vld [vmem:[%s0] sm:$0xff]
    %v38 = vld [vmem:[%s1] sm:$0xf]
    %v39 = vld [vmem:[%s1 + $0x4] sm:$0xf]
    %v40 = vld [vmem:[%s1 + $0x8] sm:$0xf]
    %v41 = vld [vmem:[%s1 + $0xc] sm:$0xf]
    %v42 = vunpack.c.l.bf16 %v38
    %v43 = vunpack.c.l.bf16 %v39
    %v44 = vunpack.c.l.bf16 %v40
    %v45 = vunpack.c.l.bf16 %v41
    %v46 = vmul.f32 %v42, %v37
    %v47 = vmul.f32 %v43, %v37
    %v48 = vmul.f32 %v44, %v37
    %v49 = vmul.f32 %v45, %v37
    %v50 = vpack.c.bf16 %v46, %v46
    %v51 = vpack.c.bf16 %v47, %v47
    %v52 = vpack.c.bf16 %v48, %v48
    %v53 = vpack.c.bf16 %v49, %v49
    %v54 = vld [vmem:[%s2] sm:$0xf]
    %v55 = vld [vmem:[%s2 + $0x4] sm:$0xf]
    %v56 = vld [vmem:[%s2 + $0x8] sm:$0xf]
    %v57 = vld [vmem:[%s2 + $0xc] sm:$0xf]
    %v58 = vld [vmem:[%s2 + $0x10] sm:$0xf]
    %v59 = vld [vmem:[%s2 + $0x14] sm:$0xf]
    %v60 = vld [vmem:[%s2 + $0x18] sm:$0xf]
    %v61 = vld [vmem:[%s2 + $0x1c] sm:$0xf]
    %v62 = vld [vmem:[%s2 + $0x20] sm:$0xf]
    %v63 = vld [vmem:[%s2 + $0x24] sm:$0xf]
    %v64 = vld [vmem:[%s2 + $0x28] sm:$0xf]
    %v65 = vld [vmem:[%s2 + $0x2c] sm:$0xf]
    %v66 = vld [vmem:[%s2 + $0x30] sm:$0xf]
    %v67 = vld [vmem:[%s2 + $0x34] sm:$0xf]
    %v68 = vld [vmem:[%s2 + $0x38] sm:$0xf]
    %v69 = vld [vmem:[%s2 + $0x3c] sm:$0xf]
    %v70 = vld [vmem:[%s4] sm:$0xff]
    %v71 = vld [vmem:[%s4 + $0x8] sm:$0xff]
    %v72 = vld [vmem:[%s4 + $0x10] sm:$0xff]
    %v73 = vld [vmem:[%s4 + $0x18] sm:$0xff]
    %v74 = vld [vmem:[%s4 + $0x20] sm:$0xff]
    %v75 = vld [vmem:[%s4 + $0x28] sm:$0xff]
    %v76 = vld [vmem:[%s4 + $0x30] sm:$0xff]
    %v77 = vld [vmem:[%s4 + $0x38] sm:$0xff]
    %v78 = vld [vmem:[%s4 + $0x40] sm:$0xff]
    %v79 = vld [vmem:[%s4 + $0x48] sm:$0xff]
    %v80 = vld [vmem:[%s4 + $0x50] sm:$0xff]
    %v81 = vld [vmem:[%s4 + $0x58] sm:$0xff]
    %v82 = vld [vmem:[%s4 + $0x60] sm:$0xff]
    %v83 = vld [vmem:[%s4 + $0x68] sm:$0xff]
    %v84 = vld [vmem:[%s4 + $0x70] sm:$0xff]
    %v85 = vld [vmem:[%s4 + $0x78] sm:$0xff]
    %87 = vset.pattern.permute.xlu0 0
    %88 = vperm.xlu0 %87, %v70
    %v89 = vpop.permute.xlu0 %88
    %92 = vset.pattern.permute.xlu0 0
    %93 = vperm.xlu0 %92, %v71
    %v94 = vpop.permute.xlu0 %93
    %97 = vset.pattern.permute.xlu0 0
    %98 = vperm.xlu0 %97, %v72
    %v99 = vpop.permute.xlu0 %98
    %102 = vset.pattern.permute.xlu0 0
    %103 = vperm.xlu0 %102, %v73
    %v104 = vpop.permute.xlu0 %103
    %107 = vset.pattern.permute.xlu0 0
    %108 = vperm.xlu0 %107, %v74
    %v109 = vpop.permute.xlu0 %108
    %112 = vset.pattern.permute.xlu0 0
    %113 = vperm.xlu0 %112, %v75
    %v114 = vpop.permute.xlu0 %113
    %117 = vset.pattern.permute.xlu0 0
    %118 = vperm.xlu0 %117, %v76
    %v119 = vpop.permute.xlu0 %118
    %122 = vset.pattern.permute.xlu0 0
    %123 = vperm.xlu0 %122, %v77
    %v124 = vpop.permute.xlu0 %123
    %127 = vset.pattern.permute.xlu0 0
    %128 = vperm.xlu0 %127, %v78
    %v129 = vpop.permute.xlu0 %128
    %132 = vset.pattern.permute.xlu0 0
    %133 = vperm.xlu0 %132, %v79
    %v134 = vpop.permute.xlu0 %133
    %137 = vset.pattern.permute.xlu0 0
    %138 = vperm.xlu0 %137, %v80
    %v139 = vpop.permute.xlu0 %138
    %142 = vset.pattern.permute.xlu0 0
    %143 = vperm.xlu0 %142, %v81
    %v144 = vpop.permute.xlu0 %143
    %147 = vset.pattern.permute.xlu0 0
    %148 = vperm.xlu0 %147, %v82
    %v149 = vpop.permute.xlu0 %148
    %152 = vset.pattern.permute.xlu0 0
    %153 = vperm.xlu0 %152, %v83
    %v154 = vpop.permute.xlu0 %153
    %157 = vset.pattern.permute.xlu0 0
    %158 = vperm.xlu0 %157, %v84
    %v159 = vpop.permute.xlu0 %158
    %162 = vset.pattern.permute.xlu0 0
    %163 = vperm.xlu0 %162, %v85
    %v164 = vpop.permute.xlu0 %163
    %v170 = vunpack.c.l.b16 %v54
    %v171 = vunpack.c.l.b16 %v55
    %v172 = vunpack.c.l.b16 %v56
    %v173 = vunpack.c.l.b16 %v57
    %v174 = vpack.c.b16 %v171, %v170
    %v175 = vpack.c.b16 %v173, %v172
    %vm176 = vcmask 64512
    %v178 = vsel %vm176, %v174, 0
    %v181 = vsel %vm176, %v175, 0
    %vm183 = vcmask 1043456
    %v185 = vsel %vm183, %v50, 0
    %187 = vmatprep.subr.bf16.mxu0 0
    %188 = vmatpush1.bf16.msra.mxu0 %v185
    %189 = vmatprep.subr.bf16.mxu0 0
    %190 = vmatpush1.bf16.msra.mxu0 0
    %191 = vmatprep.subr.bf16.mxu0 0
    %192 = vmatpush1.bf16.msra.mxu0 0
    %193 = vmatprep.subr.bf16.mxu0 0
    %194 = vmatpush1.bf16.msra.mxu0 0
    %195 = vmatprep.subr.bf16.mxu0 0
    %196 = vmatpush1.bf16.msra.mxu0 0
    %197 = vmatprep.subr.bf16.mxu0 0
    %198 = vmatpush1.bf16.msra.mxu0 0
    %199 = vmatprep.subr.bf16.mxu0 0
    %200 = vmatpush1.bf16.msra.mxu0 0
    %201 = vmatprep.subr.bf16.mxu0 0
    %202 = vmatpush1.bf16.msra.mxu0 0
    %203 = vmatprep.subr.bf16.mxu0 0
    %204 = vmatpush1.bf16.msra.mxu0 0
    %205 = vmatprep.subr.bf16.mxu0 0
    %206 = vmatpush1.bf16.msra.mxu0 0
    %207 = vmatprep.subr.bf16.mxu0 0
    %208 = vmatpush1.bf16.msra.mxu0 0
    %209 = vmatprep.subr.bf16.mxu0 0
    %210 = vmatpush1.bf16.msra.mxu0 0
    %211 = vmatprep.subr.bf16.mxu0 0
    %212 = vmatpush1.bf16.msra.mxu0 0
    %213 = vmatprep.subr.bf16.mxu0 0
    %214 = vmatpush1.bf16.msra.mxu0 0
    %215 = vmatprep.subr.bf16.mxu0 0
    %216 = vmatpush1.bf16.msra.mxu0 0
    %217 = vmatprep.subr.bf16.mxu0 0
    %218 = vmatpush1.bf16.msra.mxu0 0
    %219 = vmatprep.mubr.bf16.mxu0 0
    %220 = vmatmul.mubr.bf16.gmra.mrb[0].mxu0 %v178
    %v221 = vpop.f32.mrb[0].mxu0
    %v222 = vadd.f32 %v89, %v221
    %v223 = vpop.f32.mrb[0].mxu0
    %v224 = vpop.f32.mrb[0].mxu0
    %v225 = vadd.f32 %v94, %v224
    %v226 = vpop.f32.mrb[0].mxu0
    %227 = vmatprep.mubr.bf16.mxu0 0
    %228 = vmatmul.mubr.bf16.gmra.mrb[0].mxu0 %v181
    %v229 = vpop.f32.mrb[0].mxu0
    %v230 = vadd.f32 %v99, %v229
    %v231 = vpop.f32.mrb[0].mxu0
    %v232 = vpop.f32.mrb[0].mxu0
    %v233 = vadd.f32 %v104, %v232
    %v234 = vpop.f32.mrb[0].mxu0
    %235 = vdwg.mxu0
    %v240 = vunpack.c.l.b16 %v58
    %v241 = vunpack.c.l.b16 %v59
    %v242 = vunpack.c.l.b16 %v60
    %v243 = vunpack.c.l.b16 %v61
    %v244 = vpack.c.b16 %v241, %v240
    %v245 = vpack.c.b16 %v243, %v242
    %v247 = vsel %vm176, %v244, 0
    %v250 = vsel %vm176, %v245, 0
    %v253 = vsel %vm183, %v51, 0
    %255 = vmatprep.subr.bf16.mxu0 0
    %256 = vmatpush1.bf16.msra.mxu0 %v253
    %257 = vmatprep.subr.bf16.mxu0 0
    %258 = vmatpush1.bf16.msra.mxu0 0
    %259 = vmatprep.subr.bf16.mxu0 0
    %260 = vmatpush1.bf16.msra.mxu0 0
    %261 = vmatprep.subr.bf16.mxu0 0
    %262 = vmatpush1.bf16.msra.mxu0 0
    %263 = vmatprep.subr.bf16.mxu0 0
    %264 = vmatpush1.bf16.msra.mxu0 0
    %265 = vmatprep.subr.bf16.mxu0 0
    %266 = vmatpush1.bf16.msra.mxu0 0
    %267 = vmatprep.subr.bf16.mxu0 0
    %268 = vmatpush1.bf16.msra.mxu0 0
    %269 = vmatprep.subr.bf16.mxu0 0
    %270 = vmatpush1.bf16.msra.mxu0 0
    %271 = vmatprep.subr.bf16.mxu0 0
    %272 = vmatpush1.bf16.msra.mxu0 0
    %273 = vmatprep.subr.bf16.mxu0 0
    %274 = vmatpush1.bf16.msra.mxu0 0
    %275 = vmatprep.subr.bf16.mxu0 0
    %276 = vmatpush1.bf16.msra.mxu0 0
    %277 = vmatprep.subr.bf16.mxu0 0
    %278 = vmatpush1.bf16.msra.mxu0 0
    %279 = vmatprep.subr.bf16.mxu0 0
    %280 = vmatpush1.bf16.msra.mxu0 0
    %281 = vmatprep.subr.bf16.mxu0 0
    %282 = vmatpush1.bf16.msra.mxu0 0
    %283 = vmatprep.subr.bf16.mxu0 0
    %284 = vmatpush1.bf16.msra.mxu0 0
    %285 = vmatprep.subr.bf16.mxu0 0
    %286 = vmatpush1.bf16.msra.mxu0 0
    %287 = vmatprep.mubr.bf16.mxu0 0
    %288 = vmatmul.mubr.bf16.gmra.mrb[0].mxu0 %v247
    %v289 = vpop.f32.mrb[0].mxu0
    %v290 = vadd.f32 %v109, %v289
    %v291 = vpop.f32.mrb[0].mxu0
    %v292 = vpop.f32.mrb[0].mxu0
    %v293 = vadd.f32 %v114, %v292
    %v294 = vpop.f32.mrb[0].mxu0
    %295 = vmatprep.mubr.bf16.mxu0 0
    %296 = vmatmul.mubr.bf16.gmra.mrb[0].mxu0 %v250
    %v297 = vpop.f32.mrb[0].mxu0
    %v298 = vadd.f32 %v119, %v297
    %v299 = vpop.f32.mrb[0].mxu0
    %v300 = vpop.f32.mrb[0].mxu0
    %v301 = vadd.f32 %v124, %v300
    %v302 = vpop.f32.mrb[0].mxu0
    %303 = vdwg.mxu0
    %v308 = vunpack.c.l.b16 %v62
    %v309 = vunpack.c.l.b16 %v63
    %v310 = vunpack.c.l.b16 %v64
    %v311 = vunpack.c.l.b16 %v65
    %v312 = vpack.c.b16 %v309, %v308
    %v313 = vpack.c.b16 %v311, %v310
    %v315 = vsel %vm176, %v312, 0
    %v318 = vsel %vm176, %v313, 0
    %v321 = vsel %vm183, %v52, 0
    %323 = vmatprep.subr.bf16.mxu0 0
    %324 = vmatpush1.bf16.msra.mxu0 %v321
    %325 = vmatprep.subr.bf16.mxu0 0
    %326 = vmatpush1.bf16.msra.mxu0 0
    %327 = vmatprep.subr.bf16.mxu0 0
    %328 = vmatpush1.bf16.msra.mxu0 0
    %329 = vmatprep.subr.bf16.mxu0 0
    %330 = vmatpush1.bf16.msra.mxu0 0
    %331 = vmatprep.subr.bf16.mxu0 0
    %332 = vmatpush1.bf16.msra.mxu0 0
    %333 = vmatprep.subr.bf16.mxu0 0
    %334 = vmatpush1.bf16.msra.mxu0 0
    %335 = vmatprep.subr.bf16.mxu0 0
    %336 = vmatpush1.bf16.msra.mxu0 0
    %337 = vmatprep.subr.bf16.mxu0 0
    %338 = vmatpush1.bf16.msra.mxu0 0
    %339 = vmatprep.subr.bf16.mxu0 0
    %340 = vmatpush1.bf16.msra.mxu0 0
    %341 = vmatprep.subr.bf16.mxu0 0
    %342 = vmatpush1.bf16.msra.mxu0 0
    %343 = vmatprep.subr.bf16.mxu0 0
    %344 = vmatpush1.bf16.msra.mxu0 0
    %345 = vmatprep.subr.bf16.mxu0 0
    %346 = vmatpush1.bf16.msra.mxu0 0
    %347 = vmatprep.subr.bf16.mxu0 0
    %348 = vmatpush1.bf16.msra.mxu0 0
    %349 = vmatprep.subr.bf16.mxu0 0
    %350 = vmatpush1.bf16.msra.mxu0 0
    %351 = vmatprep.subr.bf16.mxu0 0
    %352 = vmatpush1.bf16.msra.mxu0 0
    %353 = vmatprep.subr.bf16.mxu0 0
    %354 = vmatpush1.bf16.msra.mxu0 0
    %355 = vmatprep.mubr.bf16.mxu0 0
    %356 = vmatmul.mubr.bf16.gmra.mrb[0].mxu0 %v315
    %v357 = vpop.f32.mrb[0].mxu0
    %v358 = vadd.f32 %v129, %v357
    %v359 = vpop.f32.mrb[0].mxu0
    %v360 = vpop.f32.mrb[0].mxu0
    %v361 = vadd.f32 %v134, %v360
    %v362 = vpop.f32.mrb[0].mxu0
    %363 = vmatprep.mubr.bf16.mxu0 0
    %364 = vmatmul.mubr.bf16.gmra.mrb[0].mxu0 %v318
    %v365 = vpop.f32.mrb[0].mxu0
    %v366 = vadd.f32 %v139, %v365
    %v367 = vpop.f32.mrb[0].mxu0
    %v368 = vpop.f32.mrb[0].mxu0
    %v369 = vadd.f32 %v144, %v368
    %v370 = vpop.f32.mrb[0].mxu0
    %371 = vdwg.mxu0
    %v376 = vunpack.c.l.b16 %v66
    %v377 = vunpack.c.l.b16 %v67
    %v378 = vunpack.c.l.b16 %v68
    %v379 = vunpack.c.l.b16 %v69
    %v380 = vpack.c.b16 %v377, %v376
    %v381 = vpack.c.b16 %v379, %v378
    %v383 = vsel %vm176, %v380, 0
    %v386 = vsel %vm176, %v381, 0
    %v389 = vsel %vm183, %v53, 0
    %391 = vmatprep.subr.bf16.mxu0 0
    %392 = vmatpush1.bf16.msra.mxu0 %v389
    %393 = vmatprep.subr.bf16.mxu0 0
    %394 = vmatpush1.bf16.msra.mxu0 0
    %395 = vmatprep.subr.bf16.mxu0 0
    %396 = vmatpush1.bf16.msra.mxu0 0
    %397 = vmatprep.subr.bf16.mxu0 0
    %398 = vmatpush1.bf16.msra.mxu0 0
    %399 = vmatprep.subr.bf16.mxu0 0
    %400 = vmatpush1.bf16.msra.mxu0 0
    %401 = vmatprep.subr.bf16.mxu0 0
    %402 = vmatpush1.bf16.msra.mxu0 0
    %403 = vmatprep.subr.bf16.mxu0 0
    %404 = vmatpush1.bf16.msra.mxu0 0
    %405 = vmatprep.subr.bf16.mxu0 0
    %406 = vmatpush1.bf16.msra.mxu0 0
    %407 = vmatprep.subr.bf16.mxu0 0
    %408 = vmatpush1.bf16.msra.mxu0 0
    %409 = vmatprep.subr.bf16.mxu0 0
    %410 = vmatpush1.bf16.msra.mxu0 0
    %411 = vmatprep.subr.bf16.mxu0 0
    %412 = vmatpush1.bf16.msra.mxu0 0
    %413 = vmatprep.subr.bf16.mxu0 0
    %414 = vmatpush1.bf16.msra.mxu0 0
    %415 = vmatprep.subr.bf16.mxu0 0
    %416 = vmatpush1.bf16.msra.mxu0 0
    %417 = vmatprep.subr.bf16.mxu0 0
    %418 = vmatpush1.bf16.msra.mxu0 0
    %419 = vmatprep.subr.bf16.mxu0 0
    %420 = vmatpush1.bf16.msra.mxu0 0
    %421 = vmatprep.subr.bf16.mxu0 0
    %422 = vmatpush1.bf16.msra.mxu0 0
    %423 = vmatprep.mubr.bf16.mxu0 0
    %424 = vmatmul.mubr.bf16.gmra.mrb[0].mxu0 %v383
    %v425 = vpop.f32.mrb[0].mxu0
    %v426 = vadd.f32 %v149, %v425
    %v427 = vpop.f32.mrb[0].mxu0
    %v428 = vpop.f32.mrb[0].mxu0
    %v429 = vadd.f32 %v154, %v428
    %v430 = vpop.f32.mrb[0].mxu0
    %431 = vmatprep.mubr.bf16.mxu0 0
    %432 = vmatmul.mubr.bf16.gmra.mrb[0].mxu0 %v386
    %v433 = vpop.f32.mrb[0].mxu0
    %v434 = vadd.f32 %v159, %v433
    %v435 = vpop.f32.mrb[0].mxu0
    %v436 = vpop.f32.mrb[0].mxu0
    %v437 = vadd.f32 %v164, %v436
    %v438 = vpop.f32.mrb[0].mxu0
    %439 = vdwg.mxu0
    %vm440 = vcmp.ge.f32.partialorder %v222, 0.0
    %vm441 = vcmp.ge.f32.partialorder %v225, 0.0
    %vm442 = vcmp.ge.f32.partialorder %v230, 0.0
    %vm443 = vcmp.ge.f32.partialorder %v233, 0.0
    %vm444 = vcmp.ge.f32.partialorder %v290, 0.0
    %vm445 = vcmp.ge.f32.partialorder %v293, 0.0
    %vm446 = vcmp.ge.f32.partialorder %v298, 0.0
    %vm447 = vcmp.ge.f32.partialorder %v301, 0.0
    %vm448 = vcmp.ge.f32.partialorder %v358, 0.0
    %vm449 = vcmp.ge.f32.partialorder %v361, 0.0
    %vm450 = vcmp.ge.f32.partialorder %v366, 0.0
    %vm451 = vcmp.ge.f32.partialorder %v369, 0.0
    %vm452 = vcmp.ge.f32.partialorder %v426, 0.0
    %vm453 = vcmp.ge.f32.partialorder %v429, 0.0
    %vm454 = vcmp.ge.f32.partialorder %v434, 0.0
    %vm455 = vcmp.ge.f32.partialorder %v437, 0.0
    %v456 = vmul.f32 %v222, 0.01
    %v457 = vmul.f32 %v225, 0.01
    %v458 = vmul.f32 %v230, 0.01
    %v459 = vmul.f32 %v233, 0.01
    %v460 = vmul.f32 %v290, 0.01
    %v461 = vmul.f32 %v293, 0.01
    %v462 = vmul.f32 %v298, 0.01
    %v463 = vmul.f32 %v301, 0.01
    %v464 = vmul.f32 %v358, 0.01
    %v465 = vmul.f32 %v361, 0.01
    %v466 = vmul.f32 %v366, 0.01
    %v467 = vmul.f32 %v369, 0.01
    %v468 = vmul.f32 %v426, 0.01
    %v469 = vmul.f32 %v429, 0.01
    %v470 = vmul.f32 %v434, 0.01
    %v471 = vmul.f32 %v437, 0.01
    %v472 = vsel %vm440, %v222, %v456
    %v473 = vsel %vm441, %v225, %v457
    %v474 = vsel %vm442, %v230, %v458
    %v475 = vsel %vm443, %v233, %v459
    %v476 = vsel %vm444, %v290, %v460
    %v477 = vsel %vm445, %v293, %v461
    %v478 = vsel %vm446, %v298, %v462
    %v479 = vsel %vm447, %v301, %v463
    %v480 = vsel %vm448, %v358, %v464
    %v481 = vsel %vm449, %v361, %v465
    %v482 = vsel %vm450, %v366, %v466
    %v483 = vsel %vm451, %v369, %v467
    %v484 = vsel %vm452, %v426, %v468
    %v485 = vsel %vm453, %v429, %v469
    %v486 = vsel %vm454, %v434, %v470
    %v487 = vsel %vm455, %v437, %v471
    %v488 = vpack.c.bf16 %v473, %v472
    %v489 = vpack.c.bf16 %v475, %v474
    %v490 = vpack.c.bf16 %v477, %v476
    %v491 = vpack.c.bf16 %v479, %v478
    %v492 = vpack.c.bf16 %v481, %v480
    %v493 = vpack.c.bf16 %v483, %v482
    %v494 = vpack.c.bf16 %v485, %v484
    %v495 = vpack.c.bf16 %v487, %v486
    %v496 = vld [vmem:[%s3] sm:$0xf]
    %v497 = vld [vmem:[%s3 + $0x4] sm:$0xf]
    %v498 = vld [vmem:[%s3 + $0x8] sm:$0xf]
    %v499 = vld [vmem:[%s3 + $0xc] sm:$0xf]
    %v500 = vld [vmem:[%s3 + $0x10] sm:$0xf]
    %v501 = vld [vmem:[%s3 + $0x14] sm:$0xf]
    %v502 = vld [vmem:[%s3 + $0x18] sm:$0xf]
    %v503 = vld [vmem:[%s3 + $0x1c] sm:$0xf]
    %v504 = vld [vmem:[%s3 + $0x20] sm:$0xf]
    %v505 = vld [vmem:[%s3 + $0x24] sm:$0xf]
    %v506 = vld [vmem:[%s3 + $0x28] sm:$0xf]
    %v507 = vld [vmem:[%s3 + $0x2c] sm:$0xf]
    %v508 = vld [vmem:[%s3 + $0x30] sm:$0xf]
    %v509 = vld [vmem:[%s3 + $0x34] sm:$0xf]
    %v510 = vld [vmem:[%s3 + $0x38] sm:$0xf]
    %v511 = vld [vmem:[%s3 + $0x3c] sm:$0xf]
    %v512 = vld [vmem:[%s5] sm:$0xff]
    %v513 = vld [vmem:[%s5 + $0x8] sm:$0xff]
    %v514 = vld [vmem:[%s5 + $0x10] sm:$0xff]
    %v515 = vld [vmem:[%s5 + $0x18] sm:$0xff]
    %v516 = vld [vmem:[%s5 + $0x20] sm:$0xff]
    %v517 = vld [vmem:[%s5 + $0x28] sm:$0xff]
    %v518 = vld [vmem:[%s5 + $0x30] sm:$0xff]
    %v519 = vld [vmem:[%s5 + $0x38] sm:$0xff]
    %v520 = vld [vmem:[%s5 + $0x40] sm:$0xff]
    %v521 = vld [vmem:[%s5 + $0x48] sm:$0xff]
    %v522 = vld [vmem:[%s5 + $0x50] sm:$0xff]
    %v523 = vld [vmem:[%s5 + $0x58] sm:$0xff]
    %v524 = vld [vmem:[%s5 + $0x60] sm:$0xff]
    %v525 = vld [vmem:[%s5 + $0x68] sm:$0xff]
    %v526 = vld [vmem:[%s5 + $0x70] sm:$0xff]
    %v527 = vld [vmem:[%s5 + $0x78] sm:$0xff]
    %529 = vset.pattern.permute.xlu0 0
    %530 = vperm.xlu0 %529, %v512
    %v531 = vpop.permute.xlu0 %530
    %534 = vset.pattern.permute.xlu0 0
    %535 = vperm.xlu0 %534, %v513
    %v536 = vpop.permute.xlu0 %535
    %539 = vset.pattern.permute.xlu0 0
    %540 = vperm.xlu0 %539, %v514
    %v541 = vpop.permute.xlu0 %540
    %544 = vset.pattern.permute.xlu0 0
    %545 = vperm.xlu0 %544, %v515
    %v546 = vpop.permute.xlu0 %545
    %549 = vset.pattern.permute.xlu0 0
    %550 = vperm.xlu0 %549, %v516
    %v551 = vpop.permute.xlu0 %550
    %554 = vset.pattern.permute.xlu0 0
    %555 = vperm.xlu0 %554, %v517
    %v556 = vpop.permute.xlu0 %555
    %559 = vset.pattern.permute.xlu0 0
    %560 = vperm.xlu0 %559, %v518
    %v561 = vpop.permute.xlu0 %560
    %564 = vset.pattern.permute.xlu0 0
    %565 = vperm.xlu0 %564, %v519
    %v566 = vpop.permute.xlu0 %565
    %569 = vset.pattern.permute.xlu0 0
    %570 = vperm.xlu0 %569, %v520
    %v571 = vpop.permute.xlu0 %570
    %574 = vset.pattern.permute.xlu0 0
    %575 = vperm.xlu0 %574, %v521
    %v576 = vpop.permute.xlu0 %575
    %579 = vset.pattern.permute.xlu0 0
    %580 = vperm.xlu0 %579, %v522
    %v581 = vpop.permute.xlu0 %580
    %584 = vset.pattern.permute.xlu0 0
    %585 = vperm.xlu0 %584, %v523
    %v586 = vpop.permute.xlu0 %585
    %589 = vset.pattern.permute.xlu0 0
    %590 = vperm.xlu0 %589, %v524
    %v591 = vpop.permute.xlu0 %590
    %594 = vset.pattern.permute.xlu0 0
    %595 = vperm.xlu0 %594, %v525
    %v596 = vpop.permute.xlu0 %595
    %599 = vset.pattern.permute.xlu0 0
    %600 = vperm.xlu0 %599, %v526
    %v601 = vpop.permute.xlu0 %600
    %604 = vset.pattern.permute.xlu0 0
    %605 = vperm.xlu0 %604, %v527
    %v606 = vpop.permute.xlu0 %605
    %v612 = vunpack.c.l.b16 %v496
    %v613 = vunpack.c.l.b16 %v497
    %v614 = vunpack.c.l.b16 %v498
    %v615 = vunpack.c.l.b16 %v499
    %v616 = vpack.c.b16 %v613, %v612
    %v617 = vpack.c.b16 %v615, %v614
    %vm618 = vcmask 261120
    %v620 = vsel %vm618, %v616, 0
    %v623 = vsel %vm618, %v617, 0
    %625 = vmatprep.subr.bf16.mxu0 0
    %626 = vmatpush1.bf16.msra.mxu0 %v488
    %627 = vmatprep.subr.bf16.mxu0 0
    %628 = vmatpush1.bf16.msra.mxu0 %v489
    %629 = vmatprep.subr.bf16.mxu0 0
    %630 = vmatpush1.bf16.msra.mxu0 0
    %631 = vmatprep.subr.bf16.mxu0 0
    %632 = vmatpush1.bf16.msra.mxu0 0
    %633 = vmatprep.subr.bf16.mxu0 0
    %634 = vmatpush1.bf16.msra.mxu0 0
    %635 = vmatprep.subr.bf16.mxu0 0
    %636 = vmatpush1.bf16.msra.mxu0 0
    %637 = vmatprep.subr.bf16.mxu0 0
    %638 = vmatpush1.bf16.msra.mxu0 0
    %639 = vmatprep.subr.bf16.mxu0 0
    %640 = vmatpush1.bf16.msra.mxu0 0
    %641 = vmatprep.subr.bf16.mxu0 0
    %642 = vmatpush1.bf16.msra.mxu0 0
    %643 = vmatprep.subr.bf16.mxu0 0
    %644 = vmatpush1.bf16.msra.mxu0 0
    %645 = vmatprep.subr.bf16.mxu0 0
    %646 = vmatpush1.bf16.msra.mxu0 0
    %647 = vmatprep.subr.bf16.mxu0 0
    %648 = vmatpush1.bf16.msra.mxu0 0
    %649 = vmatprep.subr.bf16.mxu0 0
    %650 = vmatpush1.bf16.msra.mxu0 0
    %651 = vmatprep.subr.bf16.mxu0 0
    %652 = vmatpush1.bf16.msra.mxu0 0
    %653 = vmatprep.subr.bf16.mxu0 0
    %654 = vmatpush1.bf16.msra.mxu0 0
    %655 = vmatprep.subr.bf16.mxu0 0
    %656 = vmatpush1.bf16.msra.mxu0 0
    %657 = vmatprep.mubr.bf16.mxu0 0
    %658 = vmatmul.mubr.bf16.gmra.mrb[0].mxu0 %v620
    %v659 = vpop.f32.mrb[0].mxu0
    %v660 = vadd.f32 %v531, %v659
    %v661 = vpop.f32.mrb[0].mxu0
    %v662 = vpop.f32.mrb[0].mxu0
    %v663 = vadd.f32 %v536, %v662
    %v664 = vpop.f32.mrb[0].mxu0
    %665 = vmatprep.mubr.bf16.mxu0 0
    %666 = vmatmul.mubr.bf16.gmra.mrb[0].mxu0 %v623
    %v667 = vpop.f32.mrb[0].mxu0
    %v668 = vadd.f32 %v541, %v667
    %v669 = vpop.f32.mrb[0].mxu0
    %v670 = vpop.f32.mrb[0].mxu0
    %v671 = vadd.f32 %v546, %v670
    %v672 = vpop.f32.mrb[0].mxu0
    %673 = vdwg.mxu0
    %v678 = vunpack.c.l.b16 %v500
    %v679 = vunpack.c.l.b16 %v501
    %v680 = vunpack.c.l.b16 %v502
    %v681 = vunpack.c.l.b16 %v503
    %v682 = vpack.c.b16 %v679, %v678
    %v683 = vpack.c.b16 %v681, %v680
    %v685 = vsel %vm618, %v682, 0
    %v688 = vsel %vm618, %v683, 0
    %690 = vmatprep.subr.bf16.mxu0 0
    %691 = vmatpush1.bf16.msra.mxu0 %v490
    %692 = vmatprep.subr.bf16.mxu0 0
    %693 = vmatpush1.bf16.msra.mxu0 %v491
    %694 = vmatprep.subr.bf16.mxu0 0
    %695 = vmatpush1.bf16.msra.mxu0 0
    %696 = vmatprep.subr.bf16.mxu0 0
    %697 = vmatpush1.bf16.msra.mxu0 0
    %698 = vmatprep.subr.bf16.mxu0 0
    %699 = vmatpush1.bf16.msra.mxu0 0
    %700 = vmatprep.subr.bf16.mxu0 0
    %701 = vmatpush1.bf16.msra.mxu0 0
    %702 = vmatprep.subr.bf16.mxu0 0
    %703 = vmatpush1.bf16.msra.mxu0 0
    %704 = vmatprep.subr.bf16.mxu0 0
    %705 = vmatpush1.bf16.msra.mxu0 0
    %706 = vmatprep.subr.bf16.mxu0 0
    %707 = vmatpush1.bf16.msra.mxu0 0
    %708 = vmatprep.subr.bf16.mxu0 0
    %709 = vmatpush1.bf16.msra.mxu0 0
    %710 = vmatprep.subr.bf16.mxu0 0
    %711 = vmatpush1.bf16.msra.mxu0 0
    %712 = vmatprep.subr.bf16.mxu0 0
    %713 = vmatpush1.bf16.msra.mxu0 0
    %714 = vmatprep.subr.bf16.mxu0 0
    %715 = vmatpush1.bf16.msra.mxu0 0
    %716 = vmatprep.subr.bf16.mxu0 0
    %717 = vmatpush1.bf16.msra.mxu0 0
    %718 = vmatprep.subr.bf16.mxu0 0
    %719 = vmatpush1.bf16.msra.mxu0 0
    %720 = vmatprep.subr.bf16.mxu0 0
    %721 = vmatpush1.bf16.msra.mxu0 0
    %722 = vmatprep.mubr.bf16.mxu0 0
    %723 = vmatmul.mubr.bf16.gmra.mrb[0].mxu0 %v685
    %v724 = vpop.f32.mrb[0].mxu0
    %v725 = vadd.f32 %v551, %v724
    %v726 = vpop.f32.mrb[0].mxu0
    %v727 = vpop.f32.mrb[0].mxu0
    %v728 = vadd.f32 %v556, %v727
    %v729 = vpop.f32.mrb[0].mxu0
    %730 = vmatprep.mubr.bf16.mxu0 0
    %731 = vmatmul.mubr.bf16.gmra.mrb[0].mxu0 %v688
    %v732 = vpop.f32.mrb[0].mxu0
    %v733 = vadd.f32 %v561, %v732
    %v734 = vpop.f32.mrb[0].mxu0
    %v735 = vpop.f32.mrb[0].mxu0
    %v736 = vadd.f32 %v566, %v735
    %v737 = vpop.f32.mrb[0].mxu0
    %738 = vdwg.mxu0
    %v743 = vunpack.c.l.b16 %v504
    %v744 = vunpack.c.l.b16 %v505
    %v745 = vunpack.c.l.b16 %v506
    %v746 = vunpack.c.l.b16 %v507
    %v747 = vpack.c.b16 %v744, %v743
    %v748 = vpack.c.b16 %v746, %v745
    %v750 = vsel %vm618, %v747, 0
    %v753 = vsel %vm618, %v748, 0
    %755 = vmatprep.subr.bf16.mxu0 0
    %756 = vmatpush1.bf16.msra.mxu0 %v492
    %757 = vmatprep.subr.bf16.mxu0 0
    %758 = vmatpush1.bf16.msra.mxu0 %v493
    %759 = vmatprep.subr.bf16.mxu0 0
    %760 = vmatpush1.bf16.msra.mxu0 0
    %761 = vmatprep.subr.bf16.mxu0 0
    %762 = vmatpush1.bf16.msra.mxu0 0
    %763 = vmatprep.subr.bf16.mxu0 0
    %764 = vmatpush1.bf16.msra.mxu0 0
    %765 = vmatprep.subr.bf16.mxu0 0
    %766 = vmatpush1.bf16.msra.mxu0 0
    %767 = vmatprep.subr.bf16.mxu0 0
    %768 = vmatpush1.bf16.msra.mxu0 0
    %769 = vmatprep.subr.bf16.mxu0 0
    %770 = vmatpush1.bf16.msra.mxu0 0
    %771 = vmatprep.subr.bf16.mxu0 0
    %772 = vmatpush1.bf16.msra.mxu0 0
    %773 = vmatprep.subr.bf16.mxu0 0
    %774 = vmatpush1.bf16.msra.mxu0 0
    %775 = vmatprep.subr.bf16.mxu0 0
    %776 = vmatpush1.bf16.msra.mxu0 0
    %777 = vmatprep.subr.bf16.mxu0 0
    %778 = vmatpush1.bf16.msra.mxu0 0
    %779 = vmatprep.subr.bf16.mxu0 0
    %780 = vmatpush1.bf16.msra.mxu0 0
    %781 = vmatprep.subr.bf16.mxu0 0
    %782 = vmatpush1.bf16.msra.mxu0 0
    %783 = vmatprep.subr.bf16.mxu0 0
    %784 = vmatpush1.bf16.msra.mxu0 0
    %785 = vmatprep.subr.bf16.mxu0 0
    %786 = vmatpush1.bf16.msra.mxu0 0
    %787 = vmatprep.mubr.bf16.mxu0 0
    %788 = vmatmul.mubr.bf16.gmra.mrb[0].mxu0 %v750
    %v789 = vpop.f32.mrb[0].mxu0
    %v790 = vadd.f32 %v571, %v789
    %v791 = vpop.f32.mrb[0].mxu0
    %v792 = vpop.f32.mrb[0].mxu0
    %v793 = vadd.f32 %v576, %v792
    %v794 = vpop.f32.mrb[0].mxu0
    %795 = vmatprep.mubr.bf16.mxu0 0
    %796 = vmatmul.mubr.bf16.gmra.mrb[0].mxu0 %v753
    %v797 = vpop.f32.mrb[0].mxu0
    %v798 = vadd.f32 %v581, %v797
    %v799 = vpop.f32.mrb[0].mxu0
    %v800 = vpop.f32.mrb[0].mxu0
    %v801 = vadd.f32 %v586, %v800
    %v802 = vpop.f32.mrb[0].mxu0
    %803 = vdwg.mxu0
    %v808 = vunpack.c.l.b16 %v508
    %v809 = vunpack.c.l.b16 %v509
    %v810 = vunpack.c.l.b16 %v510
    %v811 = vunpack.c.l.b16 %v511
    %v812 = vpack.c.b16 %v809, %v808
    %v813 = vpack.c.b16 %v811, %v810
    %v815 = vsel %vm618, %v812, 0
    %v818 = vsel %vm618, %v813, 0
    %820 = vmatprep.subr.bf16.mxu0 0
    %821 = vmatpush1.bf16.msra.mxu0 %v494
    %822 = vmatprep.subr.bf16.mxu0 0
    %823 = vmatpush1.bf16.msra.mxu0 %v495
    %824 = vmatprep.subr.bf16.mxu0 0
    %825 = vmatpush1.bf16.msra.mxu0 0
    %826 = vmatprep.subr.bf16.mxu0 0
    %827 = vmatpush1.bf16.msra.mxu0 0
    %828 = vmatprep.subr.bf16.mxu0 0
    %829 = vmatpush1.bf16.msra.mxu0 0
    %830 = vmatprep.subr.bf16.mxu0 0
    %831 = vmatpush1.bf16.msra.mxu0 0
    %832 = vmatprep.subr.bf16.mxu0 0
    %833 = vmatpush1.bf16.msra.mxu0 0
    %834 = vmatprep.subr.bf16.mxu0 0
    %835 = vmatpush1.bf16.msra.mxu0 0
    %836 = vmatprep.subr.bf16.mxu0 0
    %837 = vmatpush1.bf16.msra.mxu0 0
    %838 = vmatprep.subr.bf16.mxu0 0
    %839 = vmatpush1.bf16.msra.mxu0 0
    %840 = vmatprep.subr.bf16.mxu0 0
    %841 = vmatpush1.bf16.msra.mxu0 0
    %842 = vmatprep.subr.bf16.mxu0 0
    %843 = vmatpush1.bf16.msra.mxu0 0
    %844 = vmatprep.subr.bf16.mxu0 0
    %845 = vmatpush1.bf16.msra.mxu0 0
    %846 = vmatprep.subr.bf16.mxu0 0
    %847 = vmatpush1.bf16.msra.mxu0 0
    %848 = vmatprep.subr.bf16.mxu0 0
    %849 = vmatpush1.bf16.msra.mxu0 0
    %850 = vmatprep.subr.bf16.mxu0 0
    %851 = vmatpush1.bf16.msra.mxu0 0
    %852 = vmatprep.mubr.bf16.mxu0 0
    %853 = vmatmul.mubr.bf16.gmra.mrb[0].mxu0 %v815
    %v854 = vpop.f32.mrb[0].mxu0
    %v855 = vadd.f32 %v591, %v854
    %v856 = vpop.f32.mrb[0].mxu0
    %v857 = vpop.f32.mrb[0].mxu0
    %v858 = vadd.f32 %v596, %v857
    %v859 = vpop.f32.mrb[0].mxu0
    %860 = vmatprep.mubr.bf16.mxu0 0
    %861 = vmatmul.mubr.bf16.gmra.mrb[0].mxu0 %v818
    %v862 = vpop.f32.mrb[0].mxu0
    %v863 = vadd.f32 %v601, %v862
    %v864 = vpop.f32.mrb[0].mxu0
    %v865 = vpop.f32.mrb[0].mxu0
    %v866 = vadd.f32 %v606, %v865
    %v867 = vpop.f32.mrb[0].mxu0
    %868 = vdwg.mxu0
    %vm869 = vcmp.ge.f32.partialorder %v660, 0.0
    %vm870 = vcmp.ge.f32.partialorder %v663, 0.0
    %vm871 = vcmp.ge.f32.partialorder %v668, 0.0
    %vm872 = vcmp.ge.f32.partialorder %v671, 0.0
    %vm873 = vcmp.ge.f32.partialorder %v725, 0.0
    %vm874 = vcmp.ge.f32.partialorder %v728, 0.0
    %vm875 = vcmp.ge.f32.partialorder %v733, 0.0
    %vm876 = vcmp.ge.f32.partialorder %v736, 0.0
    %vm877 = vcmp.ge.f32.partialorder %v790, 0.0
    %vm878 = vcmp.ge.f32.partialorder %v793, 0.0
    %vm879 = vcmp.ge.f32.partialorder %v798, 0.0
    %vm880 = vcmp.ge.f32.partialorder %v801, 0.0
    %vm881 = vcmp.ge.f32.partialorder %v855, 0.0
    %vm882 = vcmp.ge.f32.partialorder %v858, 0.0
    %vm883 = vcmp.ge.f32.partialorder %v863, 0.0
    %vm884 = vcmp.ge.f32.partialorder %v866, 0.0
    %v885 = vmul.f32 %v660, 0.01
    %v886 = vmul.f32 %v663, 0.01
    %v887 = vmul.f32 %v668, 0.01
    %v888 = vmul.f32 %v671, 0.01
    %v889 = vmul.f32 %v725, 0.01
    %v890 = vmul.f32 %v728, 0.01
    %v891 = vmul.f32 %v733, 0.01
    %v892 = vmul.f32 %v736, 0.01
    %v893 = vmul.f32 %v790, 0.01
    %v894 = vmul.f32 %v793, 0.01
    %v895 = vmul.f32 %v798, 0.01
    %v896 = vmul.f32 %v801, 0.01
    %v897 = vmul.f32 %v855, 0.01
    %v898 = vmul.f32 %v858, 0.01
    %v899 = vmul.f32 %v863, 0.01
    %v900 = vmul.f32 %v866, 0.01
    %v901 = vsel %vm869, %v660, %v885
    %v902 = vsel %vm870, %v663, %v886
    %v903 = vsel %vm871, %v668, %v887
    %v904 = vsel %vm872, %v671, %v888
    %v905 = vsel %vm873, %v725, %v889
    %v906 = vsel %vm874, %v728, %v890
    %v907 = vsel %vm875, %v733, %v891
    %v908 = vsel %vm876, %v736, %v892
    %v909 = vsel %vm877, %v790, %v893
    %v910 = vsel %vm878, %v793, %v894
    %v911 = vsel %vm879, %v798, %v895
    %v912 = vsel %vm880, %v801, %v896
    %v913 = vsel %vm881, %v855, %v897
    %v914 = vsel %vm882, %v858, %v898
    %v915 = vsel %vm883, %v863, %v899
    %v916 = vsel %vm884, %v866, %v900
    %v917 = vpack.c.bf16 %v902, %v901
    %v918 = vpack.c.bf16 %v904, %v903
    %v919 = vpack.c.bf16 %v906, %v905
    %v920 = vpack.c.bf16 %v908, %v907
    %v921 = vpack.c.bf16 %v910, %v909
    %v922 = vpack.c.bf16 %v912, %v911
    %v923 = vpack.c.bf16 %v914, %v913
    %v924 = vpack.c.bf16 %v916, %v915
    %v925 = vld [vmem:[%s7] sm:$0xf]
    %v926 = vld [vmem:[%s7 + $0x4] sm:$0xf]
    %v927 = vld [vmem:[%s7 + $0x8] sm:$0xf]
    %v928 = vld [vmem:[%s7 + $0xc] sm:$0xf]
    %v929 = vld [vmem:[%s8] sm:$0xff]
    %v930 = vld [vmem:[%s8 + $0x8] sm:$0xff]
    %v931 = vld [vmem:[%s8 + $0x10] sm:$0xff]
    %v932 = vld [vmem:[%s8 + $0x18] sm:$0xff]
    %934 = vset.pattern.permute.xlu0 0
    %935 = vperm.xlu0 %934, %v929
    %v936 = vpop.permute.xlu0 %935
    %939 = vset.pattern.permute.xlu0 0
    %940 = vperm.xlu0 %939, %v930
    %v941 = vpop.permute.xlu0 %940
    %944 = vset.pattern.permute.xlu0 0
    %945 = vperm.xlu0 %944, %v931
    %v946 = vpop.permute.xlu0 %945
    %949 = vset.pattern.permute.xlu0 0
    %950 = vperm.xlu0 %949, %v932
    %v951 = vpop.permute.xlu0 %950
    %v954 = vsel %vm618, %v925, 0
    %956 = vmatprep.subr.bf16.mxu0 0
    %957 = vmatpush1.bf16.msra.mxu0 %v917
    %958 = vmatprep.subr.bf16.mxu0 0
    %959 = vmatpush1.bf16.msra.mxu0 %v918
    %960 = vmatprep.subr.bf16.mxu0 0
    %961 = vmatpush1.bf16.msra.mxu0 0
    %962 = vmatprep.subr.bf16.mxu0 0
    %963 = vmatpush1.bf16.msra.mxu0 0
    %964 = vmatprep.subr.bf16.mxu0 0
    %965 = vmatpush1.bf16.msra.mxu0 0
    %966 = vmatprep.subr.bf16.mxu0 0
    %967 = vmatpush1.bf16.msra.mxu0 0
    %968 = vmatprep.subr.bf16.mxu0 0
    %969 = vmatpush1.bf16.msra.mxu0 0
    %970 = vmatprep.subr.bf16.mxu0 0
    %971 = vmatpush1.bf16.msra.mxu0 0
    %972 = vmatprep.subr.bf16.mxu0 0
    %973 = vmatpush1.bf16.msra.mxu0 0
    %974 = vmatprep.subr.bf16.mxu0 0
    %975 = vmatpush1.bf16.msra.mxu0 0
    %976 = vmatprep.subr.bf16.mxu0 0
    %977 = vmatpush1.bf16.msra.mxu0 0
    %978 = vmatprep.subr.bf16.mxu0 0
    %979 = vmatpush1.bf16.msra.mxu0 0
    %980 = vmatprep.subr.bf16.mxu0 0
    %981 = vmatpush1.bf16.msra.mxu0 0
    %982 = vmatprep.subr.bf16.mxu0 0
    %983 = vmatpush1.bf16.msra.mxu0 0
    %984 = vmatprep.subr.bf16.mxu0 0
    %985 = vmatpush1.bf16.msra.mxu0 0
    %986 = vmatprep.subr.bf16.mxu0 0
    %987 = vmatpush1.bf16.msra.mxu0 0
    %988 = vmatprep.mubr.bf16.mxu0 0
    %989 = vmatmul.mubr.bf16.gmra.mrb[0].mxu0 %v954
    %v990 = vpop.f32.mrb[0].mxu0
    %v991 = vadd.f32 %v936, %v990
    %v992 = vpop.f32.mrb[0].mxu0
    %v993 = vpop.f32.mrb[0].mxu0
    %v994 = vpop.f32.mrb[0].mxu0
    %995 = vdwg.mxu0
    %v997 = vsel %vm618, %v926, 0
    %999 = vmatprep.subr.bf16.mxu0 0
    %1000 = vmatpush1.bf16.msra.mxu0 %v919
    %1001 = vmatprep.subr.bf16.mxu0 0
    %1002 = vmatpush1.bf16.msra.mxu0 %v920
    %1003 = vmatprep.subr.bf16.mxu0 0
    %1004 = vmatpush1.bf16.msra.mxu0 0
    %1005 = vmatprep.subr.bf16.mxu0 0
    %1006 = vmatpush1.bf16.msra.mxu0 0
    %1007 = vmatprep.subr.bf16.mxu0 0
    %1008 = vmatpush1.bf16.msra.mxu0 0
    %1009 = vmatprep.subr.bf16.mxu0 0
    %1010 = vmatpush1.bf16.msra.mxu0 0
    %1011 = vmatprep.subr.bf16.mxu0 0
    %1012 = vmatpush1.bf16.msra.mxu0 0
    %1013 = vmatprep.subr.bf16.mxu0 0
    %1014 = vmatpush1.bf16.msra.mxu0 0
    %1015 = vmatprep.subr.bf16.mxu0 0
    %1016 = vmatpush1.bf16.msra.mxu0 0
    %1017 = vmatprep.subr.bf16.mxu0 0
    %1018 = vmatpush1.bf16.msra.mxu0 0
    %1019 = vmatprep.subr.bf16.mxu0 0
    %1020 = vmatpush1.bf16.msra.mxu0 0
    %1021 = vmatprep.subr.bf16.mxu0 0
    %1022 = vmatpush1.bf16.msra.mxu0 0
    %1023 = vmatprep.subr.bf16.mxu0 0
    %1024 = vmatpush1.bf16.msra.mxu0 0
    %1025 = vmatprep.subr.bf16.mxu0 0
    %1026 = vmatpush1.bf16.msra.mxu0 0
    %1027 = vmatprep.subr.bf16.mxu0 0
    %1028 = vmatpush1.bf16.msra.mxu0 0
    %1029 = vmatprep.subr.bf16.mxu0 0
    %1030 = vmatpush1.bf16.msra.mxu0 0
    %1031 = vmatprep.mubr.bf16.mxu0 0
    %1032 = vmatmul.mubr.bf16.gmra.mrb[0].mxu0 %v997
    %v1033 = vpop.f32.mrb[0].mxu0
    %v1034 = vadd.f32 %v941, %v1033
    %v1035 = vpop.f32.mrb[0].mxu0
    %v1036 = vpop.f32.mrb[0].mxu0
    %v1037 = vpop.f32.mrb[0].mxu0
    %1038 = vdwg.mxu0
    %v1040 = vsel %vm618, %v927, 0
    %1042 = vmatprep.subr.bf16.mxu0 0
    %1043 = vmatpush1.bf16.msra.mxu0 %v921
    %1044 = vmatprep.subr.bf16.mxu0 0
    %1045 = vmatpush1.bf16.msra.mxu0 %v922
    %1046 = vmatprep.subr.bf16.mxu0 0
    %1047 = vmatpush1.bf16.msra.mxu0 0
    %1048 = vmatprep.subr.bf16.mxu0 0
    %1049 = vmatpush1.bf16.msra.mxu0 0
    %1050 = vmatprep.subr.bf16.mxu0 0
    %1051 = vmatpush1.bf16.msra.mxu0 0
    %1052 = vmatprep.subr.bf16.mxu0 0
    %1053 = vmatpush1.bf16.msra.mxu0 0
    %1054 = vmatprep.subr.bf16.mxu0 0
    %1055 = vmatpush1.bf16.msra.mxu0 0
    %1056 = vmatprep.subr.bf16.mxu0 0
    %1057 = vmatpush1.bf16.msra.mxu0 0
    %1058 = vmatprep.subr.bf16.mxu0 0
    %1059 = vmatpush1.bf16.msra.mxu0 0
    %1060 = vmatprep.subr.bf16.mxu0 0
    %1061 = vmatpush1.bf16.msra.mxu0 0
    %1062 = vmatprep.subr.bf16.mxu0 0
    %1063 = vmatpush1.bf16.msra.mxu0 0
    %1064 = vmatprep.subr.bf16.mxu0 0
    %1065 = vmatpush1.bf16.msra.mxu0 0
    %1066 = vmatprep.subr.bf16.mxu0 0
    %1067 = vmatpush1.bf16.msra.mxu0 0
    %1068 = vmatprep.subr.bf16.mxu0 0
    %1069 = vmatpush1.bf16.msra.mxu0 0
    %1070 = vmatprep.subr.bf16.mxu0 0
    %1071 = vmatpush1.bf16.msra.mxu0 0
    %1072 = vmatprep.subr.bf16.mxu0 0
    %1073 = vmatpush1.bf16.msra.mxu0 0
    %1074 = vmatprep.mubr.bf16.mxu0 0
    %1075 = vmatmul.mubr.bf16.gmra.mrb[0].mxu0 %v1040
    %v1076 = vpop.f32.mrb[0].mxu0
    %v1077 = vadd.f32 %v946, %v1076
    %v1078 = vpop.f32.mrb[0].mxu0
    %v1079 = vpop.f32.mrb[0].mxu0
    %v1080 = vpop.f32.mrb[0].mxu0
    %1081 = vdwg.mxu0
    %v1083 = vsel %vm618, %v928, 0
    %1085 = vmatprep.subr.bf16.mxu0 0
    %1086 = vmatpush1.bf16.msra.mxu0 %v923
    %1087 = vmatprep.subr.bf16.mxu0 0
    %1088 = vmatpush1.bf16.msra.mxu0 %v924
    %1089 = vmatprep.subr.bf16.mxu0 0
    %1090 = vmatpush1.bf16.msra.mxu0 0
    %1091 = vmatprep.subr.bf16.mxu0 0
    %1092 = vmatpush1.bf16.msra.mxu0 0
    %1093 = vmatprep.subr.bf16.mxu0 0
    %1094 = vmatpush1.bf16.msra.mxu0 0
    %1095 = vmatprep.subr.bf16.mxu0 0
    %1096 = vmatpush1.bf16.msra.mxu0 0
    %1097 = vmatprep.subr.bf16.mxu0 0
    %1098 = vmatpush1.bf16.msra.mxu0 0
    %1099 = vmatprep.subr.bf16.mxu0 0
    %1100 = vmatpush1.bf16.msra.mxu0 0
    %1101 = vmatprep.subr.bf16.mxu0 0
    %1102 = vmatpush1.bf16.msra.mxu0 0
    %1103 = vmatprep.subr.bf16.mxu0 0
    %1104 = vmatpush1.bf16.msra.mxu0 0
    %1105 = vmatprep.subr.bf16.mxu0 0
    %1106 = vmatpush1.bf16.msra.mxu0 0
    %1107 = vmatprep.subr.bf16.mxu0 0
    %1108 = vmatpush1.bf16.msra.mxu0 0
    %1109 = vmatprep.subr.bf16.mxu0 0
    %1110 = vmatpush1.bf16.msra.mxu0 0
    %1111 = vmatprep.subr.bf16.mxu0 0
    %1112 = vmatpush1.bf16.msra.mxu0 0
    %1113 = vmatprep.subr.bf16.mxu0 0
    %1114 = vmatpush1.bf16.msra.mxu0 0
    %1115 = vmatprep.subr.bf16.mxu0 0
    %1116 = vmatpush1.bf16.msra.mxu0 0
    %1117 = vmatprep.mubr.bf16.mxu0 0
    %1118 = vmatmul.mubr.bf16.gmra.mrb[0].mxu0 %v1083
    %v1119 = vpop.f32.mrb[0].mxu0
    %v1120 = vadd.f32 %v951, %v1119
    %v1121 = vpop.f32.mrb[0].mxu0
    %v1122 = vpop.f32.mrb[0].mxu0
    %v1123 = vpop.f32.mrb[0].mxu0
    %1124 = vdwg.mxu0
    %v1125 = vld [vmem:[%s6] sm:$0xf]
    %v1126 = vld [vmem:[%s6 + $0x4] sm:$0xf]
    %v1127 = vld [vmem:[%s6 + $0x8] sm:$0xf]
    %v1128 = vld [vmem:[%s6 + $0xc] sm:$0xf]
    %v1129 = vunpack.c.l.bf16 %v1125
    %v1130 = vunpack.c.l.bf16 %v1126
    %v1131 = vunpack.c.l.bf16 %v1127
    %v1132 = vunpack.c.l.bf16 %v1128
    %v1133 = vmul.f32 %v1129, %v991
    %v1134 = vmul.f32 %v1130, %v1034
    %v1135 = vmul.f32 %v1131, %v1077
    %v1136 = vmul.f32 %v1132, %v1120
    %v1137 = vadd.f32 %v1133, %v1134
    %v1138 = vadd.f32 %v1137, %v1135
    %v1139 = vadd.f32 %v1138, %v1136
    %p1140 = scmp.eq.s32.totalorder 0, 0
    // Predicated region
    $region42: #{tpu_custom_call.1} parent=1 // pred_check
      %p1141 = pneg %p1140
    $region43: #{tpu_custom_call.1} parent=1 // pred_check_branch
      %1143 = sbr.rel (%p1141) target = $region45
    $region44: #{tpu_custom_call.1} parent=1 // pred_region
      %v1144 = vld [vmem:[%s9] sm:$0xff]
      %1146 = vset.pattern.permute.xlu0 0
      %1147 = vperm.xlu0 %1146, %v1144
      %v1148 = vpop.permute.xlu0 %1147
      %1150 = vst [vmem:[#allocation2] sm:$0xff] %v1148
    $region45: #{tpu_custom_call.1} parent=1 // pred_fallthru
      _
    %v1151 = vld [vmem:[#allocation2] sm:$0xff]
    %v1152 = vadd.f32 %v1151, %v1139
    %1153 = vst [vmem:[#allocation2] sm:$0xff] %v1152
    // Predicated region
    $region46: #{tpu_custom_call.1} parent=1 // pred_check
      _
    $region47: #{tpu_custom_call.1} parent=1 // pred_check_branch
      %1155 = sbr.rel (0) target = $region49
    $region48: #{tpu_custom_call.1} parent=1 // pred_region
      %s1157 = ssub.s32 128, 128
      %1158 = vsyncadd [#allocation3], %s1157
      %s1160 = sshll.u32 [#allocation2], 4
      %s1161 = int_to_ptr.vmem [resolvable:$true] %s1160
      %1163 = dma.vmem_to_hbm [thread:$0]  %s1161, 128, %s10, [#allocation3]
    $region49: #{tpu_custom_call.1} parent=1 // pred_fallthru
      _
    // Predicated region
    $region50: #{tpu_custom_call.1} parent=1 // pred_check
      _
    $region51: #{tpu_custom_call.1} parent=1 // pred_check_branch
      %1165 = sbr.rel (0) target = $region53
    $region52: #{tpu_custom_call.1} parent=1 // pred_region
      %1166 = dma.done [#allocation3], 128
    $region53: #{tpu_custom_call.1} parent=1 // pred_fallthru
      _
    %1167 = vsyncpa [#allocation3], 1

</llo_original>
